<compile_context>
chip_gen: v6e
topology: v6e:2x2x1
jax: 0.10.0
libtpu: 0.0.40
codegen_flags: <defaults>
</compile_context>

<pallas_src>
import math

import jax
import jax.numpy as jnp
from jax.experimental import pallas as pl
from jax.experimental.pallas import tpu as pltpu


def _mha_kernel(q_ref, k_ref, v_ref, bias_ref,
                wq_ref, bq_ref, wk_ref, bk_ref,
                wv_ref, bv_ref, wp_ref, bp_ref,
                o_ref, acc_ref):
    h = pl.program_id(1)
    NB, S, E = q_ref.shape
    _, T, _ = k_ref.shape
    D = wq_ref.shape[2]
    dt = q_ref.dtype                      # MXU operand dtype (bf16 stays bf16)

    @pl.when(h == 0)
    def _init():
        acc_ref[...] = jnp.zeros_like(acc_ref)

    q2 = q_ref[...].reshape(NB * S, E)
    k2 = k_ref[...].reshape(NB * T, E)
    v2 = v_ref[...].reshape(NB * T, E)

    # Per-head projections; weights already transposed (y = x @ W_t + b) and
    # the 1/sqrt(D) scale already folded into wq / bq by the wrapper.
    qh = (jnp.dot(q2, wq_ref[0], preferred_element_type=jnp.float32)
          + bq_ref[0]).astype(dt).reshape(NB, S, D)
    kh = (jnp.dot(k2, wk_ref[0], preferred_element_type=jnp.float32)
          + bk_ref[0]).astype(dt).reshape(NB, T, D)
    vh = (jnp.dot(v2, wv_ref[0], preferred_element_type=jnp.float32)
          + bv_ref[0]).astype(dt).reshape(NB, T, D)

    # Scores for this head over the whole batch block (f32 accumulate), then a
    # single additive mask-bias add (no compare/select, no per-head rescale).
    s = jnp.einsum('bsd,btd->bst', qh, kh, preferred_element_type=jnp.float32)
    s = s + bias_ref[...]

    # Numerically-stable softmax along T, kept in f32; divide -> EUP reciprocal.
    m = jnp.max(s, axis=-1, keepdims=True)
    p = jnp.exp(s - m)
    denom = jnp.sum(p, axis=-1, keepdims=True)
    a = p * pl.reciprocal(denom, approx=True)

    # TODO(synk): attn_drop (nn.Dropout) omitted -- eval-mode identity.
    y = jnp.einsum('bst,btd->bsd', a.astype(dt), vh,
                   preferred_element_type=jnp.float32)        # (NB, S, D)

    # Per-head slice of the output projection, accumulated in f32:
    #   Y_concat @ Wp.T == sum_h Y_h @ Wp.T[h*D:(h+1)*D, :]
    acc_ref[...] += jnp.dot(y.astype(dt).reshape(NB * S, D), wp_ref[0],
                            preferred_element_type=jnp.float32)

    @pl.when(h == pl.num_programs(1) - 1)
    def _finalize():
        out = acc_ref[...] + bp_ref[...]
        o_ref[...] = out.reshape(NB, S, E).astype(o_ref.dtype)


def _pick_batch_block(N, S, target_rows=256):
    """Largest divisor of N so NB*S rows feed the MXU reasonably, while keeping
    at least two parallel grid steps (v7x megacore) when N >= 2."""
    cap = max(1, min(N, target_rows // max(S, 1)))
    if N >= 2:
        cap = min(cap, N // 2)
    cap = max(cap, 1)
    for nb in range(cap, 0, -1):
        if N % nb == 0:
            return nb
    return 1


def multi_head_attention(query, key, value, params, *, num_heads, attn_mask=None):
    """Pallas MHA forward. query (N,S,E), key/value (N,T,E) -> (N,S,E)."""
    N, S, E = query.shape
    _, T, _ = key.shape
    assert E % num_heads == 0
    H = num_heads
    D = E // H
    scale = 1.0 / math.sqrt(D)

    wq, bq, wk, bk, wv, bv, wp, bp = params

    # One-time, wrapper-side layout work (free relative to the kernel):
    #   * transpose nn.Linear weights so the kernel never transposes
    #   * fold the 1/sqrt(D) attention scale into the query projection
    #   * split the head axis out so each grid step DMAs only its own slab
    def col_split(w_t):                    # (E, E)[in, out] -> (H, E, D)
        return w_t.reshape(E, H, D).transpose(1, 0, 2)

    wq_h = col_split(wq.T * scale)
    wk_h = col_split(wk.T)
    wv_h = col_split(wv.T)
    bq_h = (bq * scale).reshape(H, 1, D)
    bk_h = bk.reshape(H, 1, D)
    bv_h = bv.reshape(H, 1, D)
    wp_h = wp.T.reshape(H, D, E)           # rows of Wp.T, split per head
    bp_r = bp.reshape(1, E)

    # Mask -> additive bias, computed once.  Large finite negative (not -inf)
    # so fully-masked rows don't produce NaNs; stored in the network dtype.
    if attn_mask is None:
        bias = jnp.zeros((S, T), dtype=query.dtype)
    else:
        bias = jnp.where(attn_mask == 0, -1e30, 0.0).astype(query.dtype)

    NB = _pick_batch_block(N, S)
    grid = (N // NB, H)

    # Rough VMEM budget: double-buffered blocks + f32 accumulator, clamped to
    # stay inside v7x's 64 MiB VMEM.
    a_item = query.dtype.itemsize
    w_item = wq.dtype.itemsize
    block_bytes = ((2 * NB * S * E + 2 * NB * T * E + S * T) * a_item
                   + (4 * E * D + 3 * D + E) * w_item)
    vmem_limit = int(min(max(2 * block_bytes + NB * S * E * 4 + (4 << 20),
                             32 << 20), 64 << 20))

    return pl.pallas_call(
        _mha_kernel,
        out_shape=jax.ShapeDtypeStruct((N, S, E), query.dtype),
        grid_spec=pltpu.PrefetchScalarGridSpec(
            num_scalar_prefetch=0,
            grid=grid,
            in_specs=[
                pl.BlockSpec((NB, S, E), lambda n, h: (n, 0, 0)),   # query
                pl.BlockSpec((NB, T, E), lambda n, h: (n, 0, 0)),   # key
                pl.BlockSpec((NB, T, E), lambda n, h: (n, 0, 0)),   # value
                pl.BlockSpec((S, T),     lambda n, h: (0, 0)),      # mask bias
                pl.BlockSpec((1, E, D),  lambda n, h: (h, 0, 0)),   # Wq[h]
                pl.BlockSpec((1, 1, D),  lambda n, h: (h, 0, 0)),   # bq[h]
                pl.BlockSpec((1, E, D),  lambda n, h: (h, 0, 0)),   # Wk[h]
                pl.BlockSpec((1, 1, D),  lambda n, h: (h, 0, 0)),   # bk[h]
                pl.BlockSpec((1, E, D),  lambda n, h: (h, 0, 0)),   # Wv[h]
                pl.BlockSpec((1, 1, D),  lambda n, h: (h, 0, 0)),   # bv[h]
                pl.BlockSpec((1, D, E),  lambda n, h: (h, 0, 0)),   # Wp[h]
                pl.BlockSpec((1, E),     lambda n, h: (0, 0)),      # bp
            ],
            out_specs=pl.BlockSpec((NB, S, E), lambda n, h: (n, 0, 0)),
            scratch_shapes=[pltpu.VMEM((NB * S, E), jnp.float32)],
        ),
        compiler_params=pltpu.CompilerParams(
            dimension_semantics=("parallel", "arbitrary"),
            vmem_limit_bytes=vmem_limit),
    )(query, key, value, bias,
      wq_h, bq_h, wk_h, bk_h, wv_h, bv_h, wp_h, bp_r)


def _reference_mha(query, key, value, params, *, num_heads, attn_mask=None):
    """Pure-JAX reference mirroring the PyTorch forward (dropout in eval)."""
    N, S, E = query.shape
    _, T, _ = key.shape
    H = num_heads
    D = E // H
    wq, bq, wk, bk, wv, bv, wp, bp = params
    Q = query @ wq.T + bq
    K = key @ wk.T + bk
    V = value @ wv.T + bv
    Qh = Q.reshape(N, S, H, D).transpose(0, 2, 1, 3)
    Kh = K.reshape(N, T, H, D).transpose(0, 2, 1, 3)
    Vh = V.reshape(N, T, H, D).transpose(0, 2, 1, 3)
    e = jnp.einsum("nhsd,nhtd->nhst", Qh, Kh) / math.sqrt(D)
    if attn_mask is not None:
        e = jnp.where(attn_mask == 0, -jnp.inf, e)
    a = jax.nn.softmax(e, axis=-1)
    Y = jnp.einsum("nhst,nhtd->nhsd", a, Vh)
    Y = Y.transpose(0, 2, 1, 3).reshape(N, S, E)
    return Y @ wp.T + bp


def _init_linear(key, fan_in, fan_out):
    # PyTorch nn.Linear default: U(-1/sqrt(fan_in), 1/sqrt(fan_in))
    kw, kb = jax.random.split(key)
    bound = 1.0 / math.sqrt(fan_in)
    w = jax.random.uniform(kw, (fan_out, fan_in), jnp.float32, -bound, bound)
    b = jax.random.uniform(kb, (fan_out,), jnp.float32, -bound, bound)
    return w, b


if __name__ == "__main__":
    N, S, T, E, H = 2, 8, 8, 32, 2

    root = jax.random.PRNGKey(0)
    k_q, k_kv, kq, kk, kv, kp = jax.random.split(root, 6)

    query = jax.random.normal(k_q, (N, S, E), jnp.float32)
    kvdat = jax.random.normal(k_kv, (N, T, E), jnp.float32)

    wq, bq = _init_linear(kq, E, E)
    wk, bk = _init_linear(kk, E, E)
    wv, bv = _init_linear(kv, E, E)
    wp, bp = _init_linear(kp, E, E)
    params = (wq, bq, wk, bk, wv, bv, wp, bp)

    # causal mask (S, T): mask[i, j] == 0 -> position j masked for query i
    attn_mask = jnp.tril(jnp.ones((S, T), jnp.float32))

    out = multi_head_attention(query, kvdat, kvdat, params,
                               num_heads=H, attn_mask=attn_mask)
    out = jax.block_until_ready(out)

    ref = _reference_mha(query, kvdat, kvdat, params,
                         num_heads=H, attn_mask=attn_mask)
    assert out.shape == (N, S, E)
    # slightly relaxed tolerance: kernel softmax uses the EUP approx reciprocal
    assert jnp.allclose(out, ref, atol=5e-3, rtol=5e-3), float(
        jnp.max(jnp.abs(out - ref)))

    # unmasked self-attention path
    out2 = jax.block_until_ready(
        multi_head_attention(query, query, query, params, num_heads=H))
    ref2 = _reference_mha(query, query, query, params, num_heads=H)
    assert jnp.allclose(out2, ref2, atol=5e-3, rtol=5e-3), float(
        jnp.max(jnp.abs(out2 - ref2)))

    print("KERNEL_OK")
</pallas_src>

<mosaic_0001>
module attributes {stable_mosaic.version = 11 : i64} {
  func.func @_mha_kernel(%arg0: i32, %arg1: i32, %arg2: memref<1x8x32xf32, #tpu.memory_space<vmem>>, %arg3: memref<1x8x32xf32, #tpu.memory_space<vmem>>, %arg4: memref<1x8x32xf32, #tpu.memory_space<vmem>>, %arg5: memref<8x8xf32, #tpu.memory_space<vmem>>, %arg6: memref<1x32x16xf32, #tpu.memory_space<vmem>>, %arg7: memref<1x1x16xf32, #tpu.memory_space<vmem>>, %arg8: memref<1x32x16xf32, #tpu.memory_space<vmem>>, %arg9: memref<1x1x16xf32, #tpu.memory_space<vmem>>, %arg10: memref<1x32x16xf32, #tpu.memory_space<vmem>>, %arg11: memref<1x1x16xf32, #tpu.memory_space<vmem>>, %arg12: memref<1x16x32xf32, #tpu.memory_space<vmem>>, %arg13: memref<1x32xf32, #tpu.memory_space<vmem>>, %arg14: memref<1x8x32xf32, #tpu.memory_space<vmem>>, %arg15: memref<8x32xf32, #tpu.memory_space<vmem>>) attributes {dimension_semantics = [#tpu.dimension_semantics<parallel>, #tpu.dimension_semantics<arbitrary>], iteration_bounds = array<i64: 2, 2>, scalar_prefetch = 0 : i64, scratch_operands = 1 : i64, tpu.core_type = #tpu.core_type<tc>, window_params = [{transform_indices = @transform_0, window_bounds = array<i64: 1, 8, 32>}, {transform_indices = @transform_1, window_bounds = array<i64: 1, 8, 32>}, {transform_indices = @transform_2, window_bounds = array<i64: 1, 8, 32>}, {pipeline_mode = #tpu.pipeline_mode<synchronous>, transform_indices = @transform_3, window_bounds = array<i64: 8, 8>}, {transform_indices = @transform_4, window_bounds = array<i64: 1, 32, 16>}, {transform_indices = @transform_5, window_bounds = array<i64: 1, 1, 16>}, {transform_indices = @transform_6, window_bounds = array<i64: 1, 32, 16>}, {transform_indices = @transform_7, window_bounds = array<i64: 1, 1, 16>}, {transform_indices = @transform_8, window_bounds = array<i64: 1, 32, 16>}, {transform_indices = @transform_9, window_bounds = array<i64: 1, 1, 16>}, {transform_indices = @transform_10, window_bounds = array<i64: 1, 16, 32>}, {pipeline_mode = #tpu.pipeline_mode<synchronous>, transform_indices = @transform_11, window_bounds = array<i64: 1, 32>}, {transform_indices = @transform_12, window_bounds = array<i64: 1, 8, 32>}]} {
    %c0_i32 = arith.constant 0 : i32
    %0 = arith.cmpi eq, %arg1, %c0_i32 : i32
    %1 = arith.extui %0 : i1 to i32
    %c0_i32_0 = arith.constant 0 : i32
    %2 = arith.cmpi ne, %1, %c0_i32_0 : i32
    scf.if %2 {
      %cst_44 = arith.constant 0.000000e+00 : f32
      %58 = vector.broadcast %cst_44 : f32 to vector<8x32xf32>
      %c0_45 = arith.constant 0 : index
      %c0_46 = arith.constant 0 : index
      %59 = vector.load %arg15[%c0_45, %c0_46] : memref<8x32xf32, #tpu.memory_space<vmem>>, vector<8x32xf32>
      tpu.vector_store %arg15[%c0_45, %c0_46], %58 {strides = array<i32>} : memref<8x32xf32, #tpu.memory_space<vmem>>, vector<8x32xf32>,
    } else {
    }
    %c0 = arith.constant 0 : index
    %c0_1 = arith.constant 0 : index
    %c0_2 = arith.constant 0 : index
    %3 = vector.load %arg2[%c0, %c0_1, %c0_2] : memref<1x8x32xf32, #tpu.memory_space<vmem>>, vector<1x8x32xf32>
    %4 = vector.shape_cast %3 : vector<1x8x32xf32> to vector<8x32xf32>
    %c0_3 = arith.constant 0 : index
    %c0_4 = arith.constant 0 : index
    %c0_5 = arith.constant 0 : index
    %5 = vector.load %arg3[%c0_3, %c0_4, %c0_5] : memref<1x8x32xf32, #tpu.memory_space<vmem>>, vector<1x8x32xf32>
    %6 = vector.shape_cast %5 : vector<1x8x32xf32> to vector<8x32xf32>
    %c0_6 = arith.constant 0 : index
    %c0_7 = arith.constant 0 : index
    %c0_8 = arith.constant 0 : index
    %7 = vector.load %arg4[%c0_6, %c0_7, %c0_8] : memref<1x8x32xf32, #tpu.memory_space<vmem>>, vector<1x8x32xf32>
    %8 = vector.shape_cast %7 : vector<1x8x32xf32> to vector<8x32xf32>
    %c0_9 = arith.constant 0 : index
    %c0_10 = arith.constant 0 : index
    %c0_11 = arith.constant 0 : index
    %9 = vector.load %arg6[%c0_9, %c0_10, %c0_11] : memref<1x32x16xf32, #tpu.memory_space<vmem>>, vector<1x32x16xf32>
    %10 = vector.shape_cast %9 : vector<1x32x16xf32> to vector<32x16xf32>
    %cst = arith.constant dense<0.000000e+00> : vector<8x16xf32>
    %11 = tpu.matmul %4, %10, %cst {dimension_numbers = #tpu.dot_dimension_numbers<[1], [0], [0], [1], [0, 0, 1, 1], [], []>} : vector<8x32xf32>, vector<32x16xf32>, vector<8x16xf32> -> vector<8x16xf32>
    %c0_12 = arith.constant 0 : index
    %c0_13 = arith.constant 0 : index
    %c0_14 = arith.constant 0 : index
    %12 = vector.load %arg7[%c0_12, %c0_13, %c0_14] : memref<1x1x16xf32, #tpu.memory_space<vmem>>, vector<1x1x16xf32>
    %13 = vector.shape_cast %12 : vector<1x1x16xf32> to vector<1x16xf32>
    %14 = vector.broadcast %13 : vector<1x16xf32> to vector<8x16xf32>
    %15 = arith.addf %11, %14 : vector<8x16xf32>
    %16 = vector.shape_cast %15 : vector<8x16xf32> to vector<1x8x16xf32>
    %c0_15 = arith.constant 0 : index
    %c0_16 = arith.constant 0 : index
    %c0_17 = arith.constant 0 : index
    %17 = vector.load %arg8[%c0_15, %c0_16, %c0_17] : memref<1x32x16xf32, #tpu.memory_space<vmem>>, vector<1x32x16xf32>
    %18 = vector.shape_cast %17 : vector<1x32x16xf32> to vector<32x16xf32>
    %cst_18 = arith.constant dense<0.000000e+00> : vector<8x16xf32>
    %19 = tpu.matmul %6, %18, %cst_18 {dimension_numbers = #tpu.dot_dimension_numbers<[1], [0], [0], [1], [0, 0, 1, 1], [], []>} : vector<8x32xf32>, vector<32x16xf32>, vector<8x16xf32> -> vector<8x16xf32>
    %c0_19 = arith.constant 0 : index
    %c0_20 = arith.constant 0 : index
    %c0_21 = arith.constant 0 : index
    %20 = vector.load %arg9[%c0_19, %c0_20, %c0_21] : memref<1x1x16xf32, #tpu.memory_space<vmem>>, vector<1x1x16xf32>
    %21 = vector.shape_cast %20 : vector<1x1x16xf32> to vector<1x16xf32>
    %22 = vector.broadcast %21 : vector<1x16xf32> to vector<8x16xf32>
    %23 = arith.addf %19, %22 : vector<8x16xf32>
    %24 = vector.shape_cast %23 : vector<8x16xf32> to vector<1x8x16xf32>
    %c0_22 = arith.constant 0 : index
    %c0_23 = arith.constant 0 : index
    %c0_24 = arith.constant 0 : index
    %25 = vector.load %arg10[%c0_22, %c0_23, %c0_24] : memref<1x32x16xf32, #tpu.memory_space<vmem>>, vector<1x32x16xf32>
    %26 = vector.shape_cast %25 : vector<1x32x16xf32> to vector<32x16xf32>
    %cst_25 = arith.constant dense<0.000000e+00> : vector<8x16xf32>
    %27 = tpu.matmul %8, %26, %cst_25 {dimension_numbers = #tpu.dot_dimension_numbers<[1], [0], [0], [1], [0, 0, 1, 1], [], []>} : vector<8x32xf32>, vector<32x16xf32>, vector<8x16xf32> -> vector<8x16xf32>
    %c0_26 = arith.constant 0 : index
    %c0_27 = arith.constant 0 : index
    %c0_28 = arith.constant 0 : index
    %28 = vector.load %arg11[%c0_26, %c0_27, %c0_28] : memref<1x1x16xf32, #tpu.memory_space<vmem>>, vector<1x1x16xf32>
    %29 = vector.shape_cast %28 : vector<1x1x16xf32> to vector<1x16xf32>
    %30 = vector.broadcast %29 : vector<1x16xf32> to vector<8x16xf32>
    %31 = arith.addf %27, %30 : vector<8x16xf32>
    %32 = vector.shape_cast %31 : vector<8x16xf32> to vector<1x8x16xf32>
    "tpu.trace_start"() <{level = 10 : i32, message = "bsd,btd->bst"}> : () -> ()
    %cst_29 = arith.constant dense<0.000000e+00> : vector<1x8x8xf32>
    %33 = tpu.matmul %16, %24, %cst_29 {dimension_numbers = #tpu.dot_dimension_numbers<[2], [2], [1], [1], [0, 0, 0, 1, 1, 1], [0], [0]>} : vector<1x8x16xf32>, vector<1x8x16xf32>, vector<1x8x8xf32> -> vector<1x8x8xf32>
    "tpu.trace_stop"() : () -> ()
    %c0_30 = arith.constant 0 : index
    %c0_31 = arith.constant 0 : index
    %34 = vector.load %arg5[%c0_30, %c0_31] : memref<8x8xf32, #tpu.memory_space<vmem>>, vector<8x8xf32>
    %35 = vector.shape_cast %34 : vector<8x8xf32> to vector<1x8x8xf32>
    %36 = arith.addf %33, %35 : vector<1x8x8xf32>
    %cst_32 = arith.constant dense<0xFF800000> : vector<1x8xf32>
    %37 = vector.multi_reduction <maximumf>, %36, %cst_32 [2] : vector<1x8x8xf32> to vector<1x8xf32>
    %38 = vector.shape_cast %37 : vector<1x8xf32> to vector<1x8x1xf32>
    %39 = vector.broadcast %38 : vector<1x8x1xf32> to vector<1x8x8xf32>
    %40 = arith.subf %36, %39 : vector<1x8x8xf32>
    %41 = math.exp %40 : vector<1x8x8xf32>
    %cst_33 = arith.constant dense<0.000000e+00> : vector<1x8xf32>
    %42 = vector.multi_reduction <add>, %41, %cst_33 [2] : vector<1x8x8xf32> to vector<1x8xf32>
    %43 = vector.shape_cast %42 : vector<1x8xf32> to vector<1x8x1xf32>
    %44 = tpu.reciprocal %43 {approx = true} : vector<1x8x1xf32> -> vector<1x8x1xf32>
    %45 = vector.broadcast %44 : vector<1x8x1xf32> to vector<1x8x8xf32>
    %46 = arith.mulf %41, %45 : vector<1x8x8xf32>
    "tpu.trace_start"() <{level = 10 : i32, message = "bst,btd->bsd"}> : () -> ()
    %cst_34 = arith.constant dense<0.000000e+00> : vector<1x8x16xf32>
    %47 = tpu.matmul %46, %32, %cst_34 {dimension_numbers = #tpu.dot_dimension_numbers<[2], [1], [1], [2], [0, 0, 0, 1, 1, 2], [0], [0]>} : vector<1x8x8xf32>, vector<1x8x16xf32>, vector<1x8x16xf32> -> vector<1x8x16xf32>
    "tpu.trace_stop"() : () -> ()
    %c0_35 = arith.constant 0 : index
    %c0_36 = arith.constant 0 : index
    %48 = vector.load %arg15[%c0_35, %c0_36] : memref<8x32xf32, #tpu.memory_space<vmem>>, vector<8x32xf32>
    %49 = vector.shape_cast %47 : vector<1x8x16xf32> to vector<8x16xf32>
    %c0_37 = arith.constant 0 : index
    %c0_38 = arith.constant 0 : index
    %c0_39 = arith.constant 0 : index
    %50 = vector.load %arg12[%c0_37, %c0_38, %c0_39] : memref<1x16x32xf32, #tpu.memory_space<vmem>>, vector<1x16x32xf32>
    %51 = vector.shape_cast %50 : vector<1x16x32xf32> to vector<16x32xf32>
    %cst_40 = arith.constant dense<0.000000e+00> : vector<8x32xf32>
    %52 = tpu.matmul %49, %51, %cst_40 {dimension_numbers = #tpu.dot_dimension_numbers<[1], [0], [0], [1], [0, 0, 1, 1], [], []>} : vector<8x16xf32>, vector<16x32xf32>, vector<8x32xf32> -> vector<8x32xf32>
    %53 = arith.addf %48, %52 : vector<8x32xf32>
    %c0_41 = arith.constant 0 : index
    %c0_42 = arith.constant 0 : index
    %54 = vector.load %arg15[%c0_41, %c0_42] : memref<8x32xf32, #tpu.memory_space<vmem>>, vector<8x32xf32>
    tpu.vector_store %arg15[%c0_41, %c0_42], %53 {strides = array<i32>} : memref<8x32xf32, #tpu.memory_space<vmem>>, vector<8x32xf32>,
    %c1_i32 = arith.constant 1 : i32
    %55 = arith.cmpi eq, %arg1, %c1_i32 : i32
    %56 = arith.extui %55 : i1 to i32
    %c0_i32_43 = arith.constant 0 : i32
    %57 = arith.cmpi ne, %56, %c0_i32_43 : i32
    scf.if %57 {
      %c0_44 = arith.constant 0 : index
      %c0_45 = arith.constant 0 : index
      %58 = vector.load %arg15[%c0_44, %c0_45] : memref<8x32xf32, #tpu.memory_space<vmem>>, vector<8x32xf32>
      %c0_46 = arith.constant 0 : index
      %c0_47 = arith.constant 0 : index
      %59 = vector.load %arg13[%c0_46, %c0_47] : memref<1x32xf32, #tpu.memory_space<vmem>>, vector<1x32xf32>
      %60 = vector.broadcast %59 : vector<1x32xf32> to vector<8x32xf32>
      %61 = arith.addf %58, %60 : vector<8x32xf32>
      %62 = vector.shape_cast %61 : vector<8x32xf32> to vector<1x8x32xf32>
      %c0_48 = arith.constant 0 : index
      %c0_49 = arith.constant 0 : index
      %c0_50 = arith.constant 0 : index
      %63 = vector.load %arg14[%c0_48, %c0_49, %c0_50] : memref<1x8x32xf32, #tpu.memory_space<vmem>>, vector<1x8x32xf32>
      tpu.vector_store %arg14[%c0_48, %c0_49, %c0_50], %62 {strides = array<i32>} : memref<1x8x32xf32, #tpu.memory_space<vmem>>, vector<1x8x32xf32>,
    } else {
    }
    return
  }
  func.func @transform_0(%arg0: i32, %arg1: i32) -> (i32, i32, i32) {
    %c0_i32 = arith.constant 0 : i32
    %c0_i32_0 = arith.constant 0 : i32
    %c0_i32_1 = arith.constant 0 : i32
    return %arg0, %c0_i32, %c0_i32_0 : i32, i32, i32
  }
  func.func @transform_1(%arg0: i32, %arg1: i32) -> (i32, i32, i32) {
    %c0_i32 = arith.constant 0 : i32
    %c0_i32_0 = arith.constant 0 : i32
    %c0_i32_1 = arith.constant 0 : i32
    return %arg0, %c0_i32, %c0_i32_0 : i32, i32, i32
  }
  func.func @transform_2(%arg0: i32, %arg1: i32) -> (i32, i32, i32) {
    %c0_i32 = arith.constant 0 : i32
    %c0_i32_0 = arith.constant 0 : i32
    %c0_i32_1 = arith.constant 0 : i32
    return %arg0, %c0_i32, %c0_i32_0 : i32, i32, i32
  }
  func.func @transform_3(%arg0: i32, %arg1: i32) -> (i32, i32) {
    %c0_i32 = arith.constant 0 : i32
    %c0_i32_0 = arith.constant 0 : i32
    %c0_i32_1 = arith.constant 0 : i32
    return %c0_i32, %c0_i32_0 : i32, i32
  }
  func.func @transform_4(%arg0: i32, %arg1: i32) -> (i32, i32, i32) {
    %c0_i32 = arith.constant 0 : i32
    %c0_i32_0 = arith.constant 0 : i32
    %c0_i32_1 = arith.constant 0 : i32
    return %arg1, %c0_i32, %c0_i32_0 : i32, i32, i32
  }
  func.func @transform_5(%arg0: i32, %arg1: i32) -> (i32, i32, i32) {
    %c0_i32 = arith.constant 0 : i32
    %c0_i32_0 = arith.constant 0 : i32
    %c0_i32_1 = arith.constant 0 : i32
    return %arg1, %c0_i32, %c0_i32_0 : i32, i32, i32
  }
  func.func @transform_6(%arg0: i32, %arg1: i32) -> (i32, i32, i32) {
    %c0_i32 = arith.constant 0 : i32
    %c0_i32_0 = arith.constant 0 : i32
    %c0_i32_1 = arith.constant 0 : i32
    return %arg1, %c0_i32, %c0_i32_0 : i32, i32, i32
  }
  func.func @transform_7(%arg0: i32, %arg1: i32) -> (i32, i32, i32) {
    %c0_i32 = arith.constant 0 : i32
    %c0_i32_0 = arith.constant 0 : i32
    %c0_i32_1 = arith.constant 0 : i32
    return %arg1, %c0_i32, %c0_i32_0 : i32, i32, i32
  }
  func.func @transform_8(%arg0: i32, %arg1: i32) -> (i32, i32, i32) {
    %c0_i32 = arith.constant 0 : i32
    %c0_i32_0 = arith.constant 0 : i32
    %c0_i32_1 = arith.constant 0 : i32
    return %arg1, %c0_i32, %c0_i32_0 : i32, i32, i32
  }
  func.func @transform_9(%arg0: i32, %arg1: i32) -> (i32, i32, i32) {
    %c0_i32 = arith.constant 0 : i32
    %c0_i32_0 = arith.constant 0 : i32
    %c0_i32_1 = arith.constant 0 : i32
    return %arg1, %c0_i32, %c0_i32_0 : i32, i32, i32
  }
  func.func @transform_10(%arg0: i32, %arg1: i32) -> (i32, i32, i32) {
    %c0_i32 = arith.constant 0 : i32
    %c0_i32_0 = arith.constant 0 : i32
    %c0_i32_1 = arith.constant 0 : i32
    return %arg1, %c0_i32, %c0_i32_0 : i32, i32, i32
  }
  func.func @transform_11(%arg0: i32, %arg1: i32) -> (i32, i32) {
    %c0_i32 = arith.constant 0 : i32
    %c0_i32_0 = arith.constant 0 : i32
    %c0_i32_1 = arith.constant 0 : i32
    return %c0_i32, %c0_i32_0 : i32, i32
  }
  func.func @transform_12(%arg0: i32, %arg1: i32) -> (i32, i32, i32) {
    %c0_i32 = arith.constant 0 : i32
    %c0_i32_0 = arith.constant 0 : i32
    %c0_i32_1 = arith.constant 0 : i32
    return %arg0, %c0_i32, %c0_i32_0 : i32, i32, i32
  }
}

</mosaic_0001>

<llo_original>
// kernel: tpu_custom_call.1
$region0: #{tpu_custom_call.1}
  #allocation0 [shape = 'u32[]', space=smem, size = 0x4, offset = 0x4, fixed_abs, tag = 'smem constant byte address 0x4 - core index']
  #allocation1 [shape = 'u32[144,128]{1,0:T(1,128)}', space=vmem, size = 0x12000, scoped, tag = 'internal scratch']
  #allocation2 [shape = 'f32[8,32]{1,0:T(8,128)}', space=vmem, size = 0x1000, scoped, tag = 'scratch operand']
  %s0 = inlined_call_operand.vmem [shape: f32[2,8,32], index: 0, kind: input, shape index: {}]
  %s1 = inlined_call_operand.vmem [shape: f32[2,8,32], index: 1, kind: input, shape index: {}]
  %s2 = inlined_call_operand.vmem [shape: f32[2,8,32], index: 2, kind: input, shape index: {}]
  %s3 = inlined_call_operand.vmem [shape: f32[8,8], index: 3, kind: input, shape index: {}]
  %s4 = inlined_call_operand.vmem [shape: f32[2,32,16], index: 4, kind: input, shape index: {}]
  %s5 = inlined_call_operand.vmem [shape: f32[2,1,16], index: 5, kind: input, shape index: {}]
  %s6 = inlined_call_operand.vmem [shape: f32[2,32,16], index: 6, kind: input, shape index: {}]
  %s7 = inlined_call_operand.vmem [shape: f32[2,1,16], index: 7, kind: input, shape index: {}]
  %s8 = inlined_call_operand.vmem [shape: f32[2,32,16], index: 8, kind: input, shape index: {}]
  %s9 = inlined_call_operand.vmem [shape: f32[2,1,16], index: 9, kind: input, shape index: {}]
  %s10 = inlined_call_operand.vmem [shape: f32[2,16,32], index: 10, kind: input, shape index: {}]
  %s11 = inlined_call_operand.vmem [shape: f32[1,32], index: 11, kind: input, shape index: {}]
  %s12 = inlined_call_operand.hbm [shape: f32[2,8,32], index: 12, kind: output, shape index: {}]
  %s13 = sld [smem:[#allocation0]]
  $region89: #{tpu_custom_call.1} parent=0
    _
  %s15 = ssub.s32 1, %s13
  %s16 = scalar_select 0, %s15, %s13
  $region1: #{tpu_custom_call.1} parent=0
    #allocation3 [shape = 'u8[8192]{0}', space=vmem, size = 0x2000, scoped, tag = 'output window, operand 0']
    #allocation4 [shape = 's32[2]{0}', space=sflag, size = 0x8, scoped, tag = 'scoped memory for tpu_custom_call.1']
    %17 = vsyncpa [#allocation4], 0
    %s18 = scalar_lea.sflag [#allocation4], 1
    %19 = vsyncpa %s18, 0
    loop: start=0, step=1, limit=6
    $region2: #{tpu_custom_call.1} parent=1 // loop_pre_header
      _
    $region3: #{tpu_custom_call.1} parent=1 // loop_header
      %s21 = sphi 0, %s25
      %p22 = scmp.ge.s32.totalorder %s21, 6
      %s28 = sphi 0, %s40
      %s29 = sphi 0, %s36
      %s30 = sphi 0, %s28
      %s31 = sphi 0, %s29
      %s32 = sphi 0, %s30
      %s33 = sphi 0, %s31
      %s43 = sphi 0, %s45
      %s46 = sphi 0, %s43
      %s47 = sphi 0, %s46
      %s63 = sphi 0, %s47
      %s69 = sphi 0, %s71
      %s72 = sphi 0, %s69
      %s73 = sphi 0, %s72
      %s89 = sphi 0, %s73
      %s95 = sphi 0, %s97
      %s98 = sphi 0, %s95
      %s99 = sphi 0, %s98
      %s115 = sphi 0, %s99
      %s119 = sphi 0, %s119
      %s121 = sphi 0, %s119
      %s122 = sphi 0, %s121
      %s136 = sphi 0, %s122
      %s142 = sphi 0, %s144
      %s145 = sphi 0, %s142
      %s146 = sphi 0, %s145
      %s162 = sphi 0, %s146
      %s168 = sphi 0, %s170
      %s171 = sphi 0, %s168
      %s172 = sphi 0, %s171
      %s188 = sphi 0, %s172
      %s194 = sphi 0, %s196
      %s197 = sphi 0, %s194
      %s198 = sphi 0, %s197
      %s214 = sphi 0, %s198
      %s220 = sphi 0, %s222
      %s223 = sphi 0, %s220
      %s224 = sphi 0, %s223
      %s240 = sphi 0, %s224
      %s246 = sphi 0, %s248
      %s249 = sphi 0, %s246
      %s250 = sphi 0, %s249
      %s266 = sphi 0, %s250
      %s272 = sphi 0, %s274
      %s275 = sphi 0, %s272
      %s276 = sphi 0, %s275
      %s292 = sphi 0, %s276
      %s298 = sphi 0, %s300
      %s301 = sphi 0, %s298
      %s302 = sphi 0, %s301
      %s318 = sphi 0, %s302
      %s322 = sphi 0, %s322
      %s324 = sphi 0, %s322
      %s325 = sphi 0, %s324
      %s339 = sphi 0, %s325
      %s345 = sphi 0, %s347
      %s348 = sphi 0, %s345
      %s349 = sphi 0, %s348
      %s365 = sphi 0, %s349
    $region4: #{tpu_custom_call.1} parent=1 // loop_header_branch
      %24 = sbr.rel (%p22) target = $region8
    $region5: #{tpu_custom_call.1} parent=1 // loop_body
      %s26 = ssub.s32 %s21, 1
      %s27 = ssub.s32 %s21, 2
      %s34 = sadd.s32 1, %s29
      %p35 = scmp.ge.s32.totalorder %s34, 2
      %s36 = scalar_select %p35, 0, %s34
      %s37 = sadd.s32 1, %s28
      %s38 = scalar_select %p35, %s37, %s28
      %p39 = scmp.ge.s32.totalorder %s38, 2
      %s40 = scalar_select %p39, 0, %s38
      %s41 = ssub.s32 %s28, %s40
      %p42 = scmp.eq.s32.totalorder %s41, 0
      %s44 = sadd.s32 %s43, 1
      %s45 = scalar_select %p42, %s43, %s44
      %p48 = pneg %p42
      %p49 = scmp.eq.s32.totalorder %s21, 3
      %p50 = por %p48, %p49
      %p51 = scmp.ne.s32.totalorder %s43, %s46
      %p52 = scmp.eq.s32.totalorder %s21, 0
      %p53 = por %p51, %p52
      %p54 = scmp.ne.s32.totalorder %s43, %s46
      %p55 = scmp.eq.s32.totalorder %s26, 3
      %p56 = por %p54, %p55
      %p57 = scmp.ne.s32.totalorder %s46, %s47
      %p58 = scmp.eq.s32.totalorder %s26, 0
      %p59 = por %p57, %p58
      %p60 = scmp.ne.s32.totalorder %s46, %s47
      %p61 = scmp.eq.s32.totalorder %s27, 3
      %p62 = por %p60, %p61
      %p64 = scmp.ne.s32.totalorder %s47, %s63
      %p65 = scmp.eq.s32.totalorder %s27, 0
      %p66 = por %p64, %p65
      %s67 = ssub.s32 %s28, %s40
      %p68 = scmp.eq.s32.totalorder %s67, 0
      %s70 = sadd.s32 %s69, 1
      %s71 = scalar_select %p68, %s69, %s70
      %p74 = pneg %p68
      %p75 = scmp.eq.s32.totalorder %s21, 3
      %p76 = por %p74, %p75
      %p77 = scmp.ne.s32.totalorder %s69, %s72
      %p78 = scmp.eq.s32.totalorder %s21, 0
      %p79 = por %p77, %p78
      %p80 = scmp.ne.s32.totalorder %s69, %s72
      %p81 = scmp.eq.s32.totalorder %s26, 3
      %p82 = por %p80, %p81
      %p83 = scmp.ne.s32.totalorder %s72, %s73
      %p84 = scmp.eq.s32.totalorder %s26, 0
      %p85 = por %p83, %p84
      %p86 = scmp.ne.s32.totalorder %s72, %s73
      %p87 = scmp.eq.s32.totalorder %s27, 3
      %p88 = por %p86, %p87
      %p90 = scmp.ne.s32.totalorder %s73, %s89
      %p91 = scmp.eq.s32.totalorder %s27, 0
      %p92 = por %p90, %p91
      %s93 = ssub.s32 %s28, %s40
      %p94 = scmp.eq.s32.totalorder %s93, 0
      %s96 = sadd.s32 %s95, 1
      %s97 = scalar_select %p94, %s95, %s96
      %p100 = pneg %p94
      %p101 = scmp.eq.s32.totalorder %s21, 3
      %p102 = por %p100, %p101
      %p103 = scmp.ne.s32.totalorder %s95, %s98
      %p104 = scmp.eq.s32.totalorder %s21, 0
      %p105 = por %p103, %p104
      %p106 = scmp.ne.s32.totalorder %s95, %s98
      %p107 = scmp.eq.s32.totalorder %s26, 3
      %p108 = por %p106, %p107
      %p109 = scmp.ne.s32.totalorder %s98, %s99
      %p110 = scmp.eq.s32.totalorder %s26, 0
      %p111 = por %p109, %p110
      %p112 = scmp.ne.s32.totalorder %s98, %s99
      %p113 = scmp.eq.s32.totalorder %s27, 3
      %p114 = por %p112, %p113
      %p116 = scmp.ne.s32.totalorder %s99, %s115
      %p117 = scmp.eq.s32.totalorder %s27, 0
      %p118 = por %p116, %p117
      %s120 = sadd.s32 %s119, 1
      %p123 = scmp.eq.s32.totalorder %s21, 3
      %p124 = scmp.ne.s32.totalorder %s119, %s121
      %p125 = scmp.eq.s32.totalorder %s21, 0
      %p126 = por %p124, %p125
      %p127 = scmp.ne.s32.totalorder %s119, %s121
      %p128 = scmp.eq.s32.totalorder %s26, 3
      %p129 = por %p127, %p128
      %p130 = scmp.ne.s32.totalorder %s121, %s122
      %p131 = scmp.eq.s32.totalorder %s26, 0
      %p132 = por %p130, %p131
      %p133 = scmp.ne.s32.totalorder %s121, %s122
      %p134 = scmp.eq.s32.totalorder %s27, 3
      %p135 = por %p133, %p134
      %p137 = scmp.ne.s32.totalorder %s122, %s136
      %p138 = scmp.eq.s32.totalorder %s27, 0
      %p139 = por %p137, %p138
      %s140 = ssub.s32 %s29, %s36
      %p141 = scmp.eq.s32.totalorder %s140, 0
      %s143 = sadd.s32 %s142, 1
      %s144 = scalar_select %p141, %s142, %s143
      %p147 = pneg %p141
      %p148 = scmp.eq.s32.totalorder %s21, 3
      %p149 = por %p147, %p148
      %p150 = scmp.ne.s32.totalorder %s142, %s145
      %p151 = scmp.eq.s32.totalorder %s21, 0
      %p152 = por %p150, %p151
      %p153 = scmp.ne.s32.totalorder %s142, %s145
      %p154 = scmp.eq.s32.totalorder %s26, 3
      %p155 = por %p153, %p154
      %p156 = scmp.ne.s32.totalorder %s145, %s146
      %p157 = scmp.eq.s32.totalorder %s26, 0
      %p158 = por %p156, %p157
      %p159 = scmp.ne.s32.totalorder %s145, %s146
      %p160 = scmp.eq.s32.totalorder %s27, 3
      %p161 = por %p159, %p160
      %p163 = scmp.ne.s32.totalorder %s146, %s162
      %p164 = scmp.eq.s32.totalorder %s27, 0
      %p165 = por %p163, %p164
      %s166 = ssub.s32 %s29, %s36
      %p167 = scmp.eq.s32.totalorder %s166, 0
      %s169 = sadd.s32 %s168, 1
      %s170 = scalar_select %p167, %s168, %s169
      %p173 = pneg %p167
      %p174 = scmp.eq.s32.totalorder %s21, 3
      %p175 = por %p173, %p174
      %p176 = scmp.ne.s32.totalorder %s168, %s171
      %p177 = scmp.eq.s32.totalorder %s21, 0
      %p178 = por %p176, %p177
      %p179 = scmp.ne.s32.totalorder %s168, %s171
      %p180 = scmp.eq.s32.totalorder %s26, 3
      %p181 = por %p179, %p180
      %p182 = scmp.ne.s32.totalorder %s171, %s172
      %p183 = scmp.eq.s32.totalorder %s26, 0
      %p184 = por %p182, %p183
      %p185 = scmp.ne.s32.totalorder %s171, %s172
      %p186 = scmp.eq.s32.totalorder %s27, 3
      %p187 = por %p185, %p186
      %p189 = scmp.ne.s32.totalorder %s172, %s188
      %p190 = scmp.eq.s32.totalorder %s27, 0
      %p191 = por %p189, %p190
      %s192 = ssub.s32 %s29, %s36
      %p193 = scmp.eq.s32.totalorder %s192, 0
      %s195 = sadd.s32 %s194, 1
      %s196 = scalar_select %p193, %s194, %s195
      %p199 = pneg %p193
      %p200 = scmp.eq.s32.totalorder %s21, 3
      %p201 = por %p199, %p200
      %p202 = scmp.ne.s32.totalorder %s194, %s197
      %p203 = scmp.eq.s32.totalorder %s21, 0
      %p204 = por %p202, %p203
      %p205 = scmp.ne.s32.totalorder %s194, %s197
      %p206 = scmp.eq.s32.totalorder %s26, 3
      %p207 = por %p205, %p206
      %p208 = scmp.ne.s32.totalorder %s197, %s198
      %p209 = scmp.eq.s32.totalorder %s26, 0
      %p210 = por %p208, %p209
      %p211 = scmp.ne.s32.totalorder %s197, %s198
      %p212 = scmp.eq.s32.totalorder %s27, 3
      %p213 = por %p211, %p212
      %p215 = scmp.ne.s32.totalorder %s198, %s214
      %p216 = scmp.eq.s32.totalorder %s27, 0
      %p217 = por %p215, %p216
      %s218 = ssub.s32 %s29, %s36
      %p219 = scmp.eq.s32.totalorder %s218, 0
      %s221 = sadd.s32 %s220, 1
      %s222 = scalar_select %p219, %s220, %s221
      %p225 = pneg %p219
      %p226 = scmp.eq.s32.totalorder %s21, 3
      %p227 = por %p225, %p226
      %p228 = scmp.ne.s32.totalorder %s220, %s223
      %p229 = scmp.eq.s32.totalorder %s21, 0
      %p230 = por %p228, %p229
      %p231 = scmp.ne.s32.totalorder %s220, %s223
      %p232 = scmp.eq.s32.totalorder %s26, 3
      %p233 = por %p231, %p232
      %p234 = scmp.ne.s32.totalorder %s223, %s224
      %p235 = scmp.eq.s32.totalorder %s26, 0
      %p236 = por %p234, %p235
      %p237 = scmp.ne.s32.totalorder %s223, %s224
      %p238 = scmp.eq.s32.totalorder %s27, 3
      %p239 = por %p237, %p238
      %p241 = scmp.ne.s32.totalorder %s224, %s240
      %p242 = scmp.eq.s32.totalorder %s27, 0
      %p243 = por %p241, %p242
      %s244 = ssub.s32 %s29, %s36
      %p245 = scmp.eq.s32.totalorder %s244, 0
      %s247 = sadd.s32 %s246, 1
      %s248 = scalar_select %p245, %s246, %s247
      %p251 = pneg %p245
      %p252 = scmp.eq.s32.totalorder %s21, 3
      %p253 = por %p251, %p252
      %p254 = scmp.ne.s32.totalorder %s246, %s249
      %p255 = scmp.eq.s32.totalorder %s21, 0
      %p256 = por %p254, %p255
      %p257 = scmp.ne.s32.totalorder %s246, %s249
      %p258 = scmp.eq.s32.totalorder %s26, 3
      %p259 = por %p257, %p258
      %p260 = scmp.ne.s32.totalorder %s249, %s250
      %p261 = scmp.eq.s32.totalorder %s26, 0
      %p262 = por %p260, %p261
      %p263 = scmp.ne.s32.totalorder %s249, %s250
      %p264 = scmp.eq.s32.totalorder %s27, 3
      %p265 = por %p263, %p264
      %p267 = scmp.ne.s32.totalorder %s250, %s266
      %p268 = scmp.eq.s32.totalorder %s27, 0
      %p269 = por %p267, %p268
      %s270 = ssub.s32 %s29, %s36
      %p271 = scmp.eq.s32.totalorder %s270, 0
      %s273 = sadd.s32 %s272, 1
      %s274 = scalar_select %p271, %s272, %s273
      %p277 = pneg %p271
      %p278 = scmp.eq.s32.totalorder %s21, 3
      %p279 = por %p277, %p278
      %p280 = scmp.ne.s32.totalorder %s272, %s275
      %p281 = scmp.eq.s32.totalorder %s21, 0
      %p282 = por %p280, %p281
      %p283 = scmp.ne.s32.totalorder %s272, %s275
      %p284 = scmp.eq.s32.totalorder %s26, 3
      %p285 = por %p283, %p284
      %p286 = scmp.ne.s32.totalorder %s275, %s276
      %p287 = scmp.eq.s32.totalorder %s26, 0
      %p288 = por %p286, %p287
      %p289 = scmp.ne.s32.totalorder %s275, %s276
      %p290 = scmp.eq.s32.totalorder %s27, 3
      %p291 = por %p289, %p290
      %p293 = scmp.ne.s32.totalorder %s276, %s292
      %p294 = scmp.eq.s32.totalorder %s27, 0
      %p295 = por %p293, %p294
      %s296 = ssub.s32 %s29, %s36
      %p297 = scmp.eq.s32.totalorder %s296, 0
      %s299 = sadd.s32 %s298, 1
      %s300 = scalar_select %p297, %s298, %s299
      %p303 = pneg %p297
      %p304 = scmp.eq.s32.totalorder %s21, 3
      %p305 = por %p303, %p304
      %p306 = scmp.ne.s32.totalorder %s298, %s301
      %p307 = scmp.eq.s32.totalorder %s21, 0
      %p308 = por %p306, %p307
      %p309 = scmp.ne.s32.totalorder %s298, %s301
      %p310 = scmp.eq.s32.totalorder %s26, 3
      %p311 = por %p309, %p310
      %p312 = scmp.ne.s32.totalorder %s301, %s302
      %p313 = scmp.eq.s32.totalorder %s26, 0
      %p314 = por %p312, %p313
      %p315 = scmp.ne.s32.totalorder %s301, %s302
      %p316 = scmp.eq.s32.totalorder %s27, 3
      %p317 = por %p315, %p316
      %p319 = scmp.ne.s32.totalorder %s302, %s318
      %p320 = scmp.eq.s32.totalorder %s27, 0
      %p321 = por %p319, %p320
      %s323 = sadd.s32 %s322, 1
      %p326 = scmp.eq.s32.totalorder %s21, 3
      %p327 = scmp.ne.s32.totalorder %s322, %s324
      %p328 = scmp.eq.s32.totalorder %s21, 0
      %p329 = por %p327, %p328
      %p330 = scmp.ne.s32.totalorder %s322, %s324
      %p331 = scmp.eq.s32.totalorder %s26, 3
      %p332 = por %p330, %p331
      %p333 = scmp.ne.s32.totalorder %s324, %s325
      %p334 = scmp.eq.s32.totalorder %s26, 0
      %p335 = por %p333, %p334
      %p336 = scmp.ne.s32.totalorder %s324, %s325
      %p337 = scmp.eq.s32.totalorder %s27, 3
      %p338 = por %p336, %p337
      %p340 = scmp.ne.s32.totalorder %s325, %s339
      %p341 = scmp.eq.s32.totalorder %s27, 0
      %p342 = por %p340, %p341
      %s343 = ssub.s32 %s28, %s40
      %p344 = scmp.eq.s32.totalorder %s343, 0
      %s346 = sadd.s32 %s345, 1
      %s347 = scalar_select %p344, %s345, %s346
      %p350 = pneg %p344
      %p351 = scmp.eq.s32.totalorder %s21, 3
      %p352 = por %p350, %p351
      %p353 = scmp.ne.s32.totalorder %s345, %s348
      %p354 = scmp.eq.s32.totalorder %s21, 0
      %p355 = por %p353, %p354
      %p356 = scmp.ne.s32.totalorder %s345, %s348
      %p357 = scmp.eq.s32.totalorder %s26, 3
      %p358 = por %p356, %p357
      %p359 = scmp.ne.s32.totalorder %s348, %s349
      %p360 = scmp.eq.s32.totalorder %s26, 0
      %p361 = por %p359, %p360
      %p362 = scmp.ne.s32.totalorder %s348, %s349
      %p363 = scmp.eq.s32.totalorder %s27, 3
      %p364 = por %p362, %p363
      %p366 = scmp.ne.s32.totalorder %s349, %s365
      %p367 = scmp.eq.s32.totalorder %s27, 0
      %p368 = por %p366, %p367
      %p369 = scmp.le.s32.totalorder 1, %s21
      %p370 = scmp.lt.s32.totalorder %s21, 5
      %p371 = pnand %p369, %p370
      %p372 = pneg %p371
      // Predicated region
      $region9: #{tpu_custom_call.1} parent=5 // pred_check
        _
      $region10: #{tpu_custom_call.1} parent=5 // pred_check_branch
        %374 = sbr.rel (%p371) target = $region12
      $region11: #{tpu_custom_call.1} parent=5 // pred_region
        %s375 = ssub.s32 %s21, 1
        // Predicated region
        $region13: #{tpu_custom_call.1} parent=11 // pred_check
          %p376 = pneg %p132
        $region14: #{tpu_custom_call.1} parent=11 // pred_check_branch
          %378 = sbr.rel (%p376) target = $region16
        $region15: #{tpu_custom_call.1} parent=11 // pred_region
          _
        $region16: #{tpu_custom_call.1} parent=11 // pred_fallthru
          _
        // Predicated region
        $region17: #{tpu_custom_call.1} parent=11 // pred_check
          %p379 = pneg %p335
        $region18: #{tpu_custom_call.1} parent=11 // pred_check_branch
          %381 = sbr.rel (%p379) target = $region20
        $region19: #{tpu_custom_call.1} parent=11 // pred_region
          _
        $region20: #{tpu_custom_call.1} parent=11 // pred_fallthru
          _
      $region12: #{tpu_custom_call.1} parent=5 // pred_fallthru
        _
      %p382 = scmp.lt.s32.totalorder %s21, 4
      // Predicated region
      $region21: #{tpu_custom_call.1} parent=5 // pred_check
        %p383 = pneg %p382
      $region22: #{tpu_custom_call.1} parent=5 // pred_check_branch
        %385 = sbr.rel (%p383) target = $region24
      $region23: #{tpu_custom_call.1} parent=5 // pred_region
        // Predicated region
        $region25: #{tpu_custom_call.1} parent=23 // pred_check
          %p386 = pneg %p53
        $region26: #{tpu_custom_call.1} parent=23 // pred_check_branch
          %388 = sbr.rel (%p386) target = $region28
        $region27: #{tpu_custom_call.1} parent=23 // pred_region
          %p389 = scmp.lt.s32.totalorder %s28, 1
          %s390 = scalar_select %p389, %s28, 1
          %s391 = smul.addr %s390, 8
          %s392 = scalar_lea.vmem %s0, %s391
        $region28: #{tpu_custom_call.1} parent=23 // pred_fallthru
          _
        // Predicated region
        $region29: #{tpu_custom_call.1} parent=23 // pred_check
          %p393 = pneg %p79
        $region30: #{tpu_custom_call.1} parent=23 // pred_check_branch
          %395 = sbr.rel (%p393) target = $region32
        $region31: #{tpu_custom_call.1} parent=23 // pred_region
          %p396 = scmp.lt.s32.totalorder %s28, 1
          %s397 = scalar_select %p396, %s28, 1
          %s398 = smul.addr %s397, 8
          %s399 = scalar_lea.vmem %s1, %s398
        $region32: #{tpu_custom_call.1} parent=23 // pred_fallthru
          _
        // Predicated region
        $region33: #{tpu_custom_call.1} parent=23 // pred_check
          %p400 = pneg %p105
        $region34: #{tpu_custom_call.1} parent=23 // pred_check_branch
          %402 = sbr.rel (%p400) target = $region36
        $region35: #{tpu_custom_call.1} parent=23 // pred_region
          %p403 = scmp.lt.s32.totalorder %s28, 1
          %s404 = scalar_select %p403, %s28, 1
          %s405 = smul.addr %s404, 8
          %s406 = scalar_lea.vmem %s2, %s405
        $region36: #{tpu_custom_call.1} parent=23 // pred_fallthru
          _
        // Predicated region
        $region37: #{tpu_custom_call.1} parent=23 // pred_check
          %p407 = pneg %p152
        $region38: #{tpu_custom_call.1} parent=23 // pred_check_branch
          %409 = sbr.rel (%p407) target = $region40
        $region39: #{tpu_custom_call.1} parent=23 // pred_region
          %p410 = scmp.lt.s32.totalorder %s29, 1
          %s411 = scalar_select %p410, %s29, 1
          %s412 = smul.addr %s411, 4
          %s413 = smul.addr %s412, 8
          %s414 = scalar_lea.vmem %s4, %s413
        $region40: #{tpu_custom_call.1} parent=23 // pred_fallthru
          _
        // Predicated region
        $region41: #{tpu_custom_call.1} parent=23 // pred_check
          %p415 = pneg %p178
        $region42: #{tpu_custom_call.1} parent=23 // pred_check_branch
          %417 = sbr.rel (%p415) target = $region44
        $region43: #{tpu_custom_call.1} parent=23 // pred_region
          %p418 = scmp.lt.s32.totalorder %s29, 1
          %s419 = scalar_select %p418, %s29, 1
          %s420 = scalar_lea.vmem %s5, %s419
        $region44: #{tpu_custom_call.1} parent=23 // pred_fallthru
          _
        // Predicated region
        $region45: #{tpu_custom_call.1} parent=23 // pred_check
          %p421 = pneg %p204
        $region46: #{tpu_custom_call.1} parent=23 // pred_check_branch
          %423 = sbr.rel (%p421) target = $region48
        $region47: #{tpu_custom_call.1} parent=23 // pred_region
          %p424 = scmp.lt.s32.totalorder %s29, 1
          %s425 = scalar_select %p424, %s29, 1
          %s426 = smul.addr %s425, 4
          %s427 = smul.addr %s426, 8
          %s428 = scalar_lea.vmem %s6, %s427
        $region48: #{tpu_custom_call.1} parent=23 // pred_fallthru
          _
        // Predicated region
        $region49: #{tpu_custom_call.1} parent=23 // pred_check
          %p429 = pneg %p230
        $region50: #{tpu_custom_call.1} parent=23 // pred_check_branch
          %431 = sbr.rel (%p429) target = $region52
        $region51: #{tpu_custom_call.1} parent=23 // pred_region
          %p432 = scmp.lt.s32.totalorder %s29, 1
          %s433 = scalar_select %p432, %s29, 1
          %s434 = scalar_lea.vmem %s7, %s433
        $region52: #{tpu_custom_call.1} parent=23 // pred_fallthru
          _
        // Predicated region
        $region53: #{tpu_custom_call.1} parent=23 // pred_check
          %p435 = pneg %p256
        $region54: #{tpu_custom_call.1} parent=23 // pred_check_branch
          %437 = sbr.rel (%p435) target = $region56
        $region55: #{tpu_custom_call.1} parent=23 // pred_region
          %p438 = scmp.lt.s32.totalorder %s29, 1
          %s439 = scalar_select %p438, %s29, 1
          %s440 = smul.addr %s439, 4
          %s441 = smul.addr %s440, 8
          %s442 = scalar_lea.vmem %s8, %s441
        $region56: #{tpu_custom_call.1} parent=23 // pred_fallthru
          _
        // Predicated region
        $region57: #{tpu_custom_call.1} parent=23 // pred_check
          %p443 = pneg %p282
        $region58: #{tpu_custom_call.1} parent=23 // pred_check_branch
          %445 = sbr.rel (%p443) target = $region60
        $region59: #{tpu_custom_call.1} parent=23 // pred_region
          %p446 = scmp.lt.s32.totalorder %s29, 1
          %s447 = scalar_select %p446, %s29, 1
          %s448 = scalar_lea.vmem %s9, %s447
        $region60: #{tpu_custom_call.1} parent=23 // pred_fallthru
          _
        // Predicated region
        $region61: #{tpu_custom_call.1} parent=23 // pred_check
          %p449 = pneg %p308
        $region62: #{tpu_custom_call.1} parent=23 // pred_check_branch
          %451 = sbr.rel (%p449) target = $region64
        $region63: #{tpu_custom_call.1} parent=23 // pred_region
          %p452 = scmp.lt.s32.totalorder %s29, 1
          %s453 = scalar_select %p452, %s29, 1
          %s454 = smul.addr %s453, 2
          %s455 = smul.addr %s454, 8
          %s456 = scalar_lea.vmem %s10, %s455
        $region64: #{tpu_custom_call.1} parent=23 // pred_fallthru
          _
      $region24: #{tpu_custom_call.1} parent=5 // pred_fallthru
        _
      %p457 = scmp.le.s32.totalorder 1, %s21
      %p458 = scmp.lt.s32.totalorder %s21, 5
      %p459 = pnand %p457, %p458
      %p460 = pneg %p459
      // Predicated region
      $region65: #{tpu_custom_call.1} parent=5 // pred_check
        _
      $region66: #{tpu_custom_call.1} parent=5 // pred_check_branch
        %462 = sbr.rel (%p459) target = $region68
      $region67: #{tpu_custom_call.1} parent=5 // pred_region
        %s463 = ssub.s32 %s21, 1
        %p464 = scmp.lt.s32.totalorder %s30, 1
        %s465 = scalar_select %p464, %s30, 1
        %s466 = smul.addr %s465, 8
        %s467 = scalar_lea.vmem %s0, %s466
        %p468 = pneg %p59
        %p469 = pneg %p56
        %p470 = scmp.lt.s32.totalorder %s30, 1
        %s471 = scalar_select %p470, %s30, 1
        %s472 = smul.addr %s471, 8
        %s473 = scalar_lea.vmem %s1, %s472
        %p474 = pneg %p85
        %p475 = pneg %p82
        %p476 = scmp.lt.s32.totalorder %s30, 1
        %s477 = scalar_select %p476, %s30, 1
        %s478 = smul.addr %s477, 8
        %s479 = scalar_lea.vmem %s2, %s478
        %p480 = pneg %p111
        %p481 = pneg %p108
        %p482 = pneg %p132
        %p483 = pneg %p129
        %p484 = scmp.lt.s32.totalorder %s31, 1
        %s485 = scalar_select %p484, %s31, 1
        %s486 = smul.addr %s485, 4
        %s487 = smul.addr %s486, 8
        %s488 = scalar_lea.vmem %s4, %s487
        %p489 = pneg %p158
        %p490 = pneg %p155
        %p491 = scmp.lt.s32.totalorder %s31, 1
        %s492 = scalar_select %p491, %s31, 1
        %s493 = scalar_lea.vmem %s5, %s492
        %p494 = pneg %p184
        %p495 = pneg %p181
        %p496 = scmp.lt.s32.totalorder %s31, 1
        %s497 = scalar_select %p496, %s31, 1
        %s498 = smul.addr %s497, 4
        %s499 = smul.addr %s498, 8
        %s500 = scalar_lea.vmem %s6, %s499
        %p501 = pneg %p210
        %p502 = pneg %p207
        %p503 = scmp.lt.s32.totalorder %s31, 1
        %s504 = scalar_select %p503, %s31, 1
        %s505 = scalar_lea.vmem %s7, %s504
        %p506 = pneg %p236
        %p507 = pneg %p233
        %p508 = scmp.lt.s32.totalorder %s31, 1
        %s509 = scalar_select %p508, %s31, 1
        %s510 = smul.addr %s509, 4
        %s511 = smul.addr %s510, 8
        %s512 = scalar_lea.vmem %s8, %s511
        %p513 = pneg %p262
        %p514 = pneg %p259
        %p515 = scmp.lt.s32.totalorder %s31, 1
        %s516 = scalar_select %p515, %s31, 1
        %s517 = scalar_lea.vmem %s9, %s516
        %p518 = pneg %p288
        %p519 = pneg %p285
        %p520 = scmp.lt.s32.totalorder %s31, 1
        %s521 = scalar_select %p520, %s31, 1
        %s522 = smul.addr %s521, 2
        %s523 = smul.addr %s522, 8
        %s524 = scalar_lea.vmem %s10, %s523
        %p525 = pneg %p314
        %p526 = pneg %p311
        %p527 = pneg %p335
        %p528 = pneg %p332
        %p529 = pneg %p361
        %p530 = pneg %p358
        %s531 = sand.u32 %s348, 1
        %s532 = scalar_lea.sflag [#allocation4], %s531
        %s533 = sand.u32 %s348, 1
        %s534 = smul.addr %s533, 8
        %s535 = scalar_lea.vmem [#allocation3], %s534
        %p536 = scmp.lt.s32.totalorder %s30, 1
        %s537 = scalar_select %p536, %s30, 1
        %s538 = smul.addr %s537, 8
        %s539 = scalar_lea.vmem %s0, %s538
        %p540 = scmp.lt.s32.totalorder %s30, 1
        %s541 = scalar_select %p540, %s30, 1
        %s542 = smul.addr %s541, 8
        %s543 = scalar_lea.vmem %s1, %s542
        %p544 = scmp.lt.s32.totalorder %s30, 1
        %s545 = scalar_select %p544, %s30, 1
        %s546 = smul.addr %s545, 8
        %s547 = scalar_lea.vmem %s2, %s546
        %p548 = scmp.lt.s32.totalorder %s31, 1
        %s549 = scalar_select %p548, %s31, 1
        %s550 = smul.addr %s549, 4
        %s551 = smul.addr %s550, 8
        %s552 = scalar_lea.vmem %s4, %s551
        %p553 = scmp.lt.s32.totalorder %s31, 1
        %s554 = scalar_select %p553, %s31, 1
        %s555 = scalar_lea.vmem %s5, %s554
        %p556 = scmp.lt.s32.totalorder %s31, 1
        %s557 = scalar_select %p556, %s31, 1
        %s558 = smul.addr %s557, 4
        %s559 = smul.addr %s558, 8
        %s560 = scalar_lea.vmem %s6, %s559
        %p561 = scmp.lt.s32.totalorder %s31, 1
        %s562 = scalar_select %p561, %s31, 1
        %s563 = scalar_lea.vmem %s7, %s562
        %p564 = scmp.lt.s32.totalorder %s31, 1
        %s565 = scalar_select %p564, %s31, 1
        %s566 = smul.addr %s565, 4
        %s567 = smul.addr %s566, 8
        %s568 = scalar_lea.vmem %s8, %s567
        %p569 = scmp.lt.s32.totalorder %s31, 1
        %s570 = scalar_select %p569, %s31, 1
        %s571 = scalar_lea.vmem %s9, %s570
        %p572 = scmp.lt.s32.totalorder %s31, 1
        %s573 = scalar_select %p572, %s31, 1
        %s574 = smul.addr %s573, 2
        %s575 = smul.addr %s574, 8
        %s576 = scalar_lea.vmem %s10, %s575
        %p577 = scmp.eq.s32.totalorder %s31, 0
        // Predicated region
        $region69: #{tpu_custom_call.1} parent=67 // pred_check
          %p578 = pneg %p577
        $region70: #{tpu_custom_call.1} parent=67 // pred_check_branch
          %580 = sbr.rel (%p578) target = $region72
        $region71: #{tpu_custom_call.1} parent=67 // pred_region
          %vm581 = vcmask 261120
          %582 = vst.msk [vmem:[#allocation2] sm:$0xff] %vm581, 0.0
        $region72: #{tpu_custom_call.1} parent=67 // pred_fallthru
          _
        %v583 = vld [vmem:[%s539] sm:$0xff]
        %v584 = vld [vmem:[%s543] sm:$0xff]
        %v585 = vld [vmem:[%s547] sm:$0xff]
        %v586 = vld [vmem:[%s552] sm:$0xff]
        %v587 = vld [vmem:[%s552 + $0x8] sm:$0xff]
        %v588 = vld [vmem:[%s552 + $0x10] sm:$0xff]
        %v589 = vld [vmem:[%s552 + $0x18] sm:$0xff]
        %v590 = vld [vmem:[%s555] sm:$0x1]
        %v592 = vlaneseq
        %v593 = vshrl.u32 %v592, 7
        %v594 = vsub.s32 0, %v593
        %v595 = vrot.slane %v590, %v594
        %vm597 = vcmask 261120
        %v599 = vsel %vm597, %v583, 0
        %601 = vmatprep.subr.mxu0 0.0
        %602 = vmatpush1.msra.mxu0 0.0
        %603 = vmatprep.subr.mxu0 0.0
        %604 = vmatpush1.msra.mxu0 0.0
        %605 = vmatprep.subr.mxu0 0.0
        %606 = vmatpush1.msra.mxu0 0.0
        %607 = vmatprep.subr.mxu0 0.0
        %608 = vmatpush1.msra.mxu0 0.0
        %609 = vmatprep.subr.mxu0 0.0
        %610 = vmatpush1.msra.mxu0 0.0
        %611 = vmatprep.subr.mxu0 0.0
        %612 = vmatpush1.msra.mxu0 0.0
        %613 = vmatprep.subr.mxu0 0.0
        %614 = vmatpush1.msra.mxu0 0.0
        %615 = vmatprep.subr.mxu0 0.0
        %616 = vmatpush1.msra.mxu0 0.0
        %617 = vmatprep.subr.mxu0 0.0
        %618 = vmatpush1.msra.mxu0 0.0
        %619 = vmatprep.subr.mxu0 0.0
        %620 = vmatpush1.msra.mxu0 0.0
        %621 = vmatprep.subr.mxu0 0.0
        %622 = vmatpush1.msra.mxu0 0.0
        %623 = vmatprep.subr.mxu0 0.0
        %624 = vmatpush1.msra.mxu0 0.0
        %625 = vmatprep.subr.mxu0 0.0
        %626 = vmatpush1.msra.mxu0 %v589
        %627 = vmatprep.subr.mxu0 0.0
        %628 = vmatpush1.msra.mxu0 %v588
        %629 = vmatprep.subr.mxu0 0.0
        %630 = vmatpush1.msra.mxu0 %v587
        %631 = vmatprep.subr.mxu0 0.0
        %632 = vmatpush1.msra.mxu0 %v586
        %633 = vmatprep.subr.mxu0 0.0
        %634 = vmatpush2.msra.mxu0 0.0
        %635 = vmatprep.subr.mxu0 0.0
        %636 = vmatpush2.msra.mxu0 0.0
        %637 = vmatprep.subr.mxu0 0.0
        %638 = vmatpush2.msra.mxu0 0.0
        %639 = vmatprep.subr.mxu0 0.0
        %640 = vmatpush2.msra.mxu0 0.0
        %641 = vmatprep.subr.mxu0 0.0
        %642 = vmatpush2.msra.mxu0 0.0
        %643 = vmatprep.subr.mxu0 0.0
        %644 = vmatpush2.msra.mxu0 0.0
        %645 = vmatprep.subr.mxu0 0.0
        %646 = vmatpush2.msra.mxu0 0.0
        %647 = vmatprep.subr.mxu0 0.0
        %648 = vmatpush2.msra.mxu0 0.0
        %649 = vmatprep.subr.mxu0 0.0
        %650 = vmatpush2.msra.mxu0 0.0
        %651 = vmatprep.subr.mxu0 0.0
        %652 = vmatpush2.msra.mxu0 0.0
        %653 = vmatprep.subr.mxu0 0.0
        %654 = vmatpush2.msra.mxu0 0.0
        %655 = vmatprep.subr.mxu0 0.0
        %656 = vmatpush2.msra.mxu0 0.0
        %657 = vmatprep.subr.mxu0 0.0
        %658 = vmatpush2.msra.mxu0 0.0
        %659 = vmatprep.subr.mxu0 0.0
        %660 = vmatpush2.msra.mxu0 0.0
        %661 = vmatprep.subr.mxu0 0.0
        %662 = vmatpush2.msra.mxu0 0.0
        %663 = vmatprep.subr.mxu0 0.0
        %664 = vmatpush2.msra.mxu0 0.0
        %665 = vmatprep.mubr.f32.mxu0 0.0
        %666 = vmatmul.mubr.f32.gmra.mxu0 %v599
        %v667 = vpop.f32.mrf.mxu0
        %v668 = vadd.f32 %v595, %v667
        %v669 = vpop.f32.mrf.mxu0
        %670 = vdwg.mxu0
        %v671 = vld [vmem:[%s560] sm:$0xff]
        %v672 = vld [vmem:[%s560 + $0x8] sm:$0xff]
        %v673 = vld [vmem:[%s560 + $0x10] sm:$0xff]
        %v674 = vld [vmem:[%s560 + $0x18] sm:$0xff]
        %v675 = vld [vmem:[%s563] sm:$0x1]
        %v677 = vlaneseq
        %v678 = vshrl.u32 %v677, 7
        %v679 = vsub.s32 0, %v678
        %v680 = vrot.slane %v675, %v679
        %v683 = vsel %vm597, %v584, 0
        %685 = vmatprep.subr.mxu0 0.0
        %686 = vmatpush1.msra.mxu0 0.0
        %687 = vmatprep.subr.mxu0 0.0
        %688 = vmatpush1.msra.mxu0 0.0
        %689 = vmatprep.subr.mxu0 0.0
        %690 = vmatpush1.msra.mxu0 0.0
        %691 = vmatprep.subr.mxu0 0.0
        %692 = vmatpush1.msra.mxu0 0.0
        %693 = vmatprep.subr.mxu0 0.0
        %694 = vmatpush1.msra.mxu0 0.0
        %695 = vmatprep.subr.mxu0 0.0
        %696 = vmatpush1.msra.mxu0 0.0
        %697 = vmatprep.subr.mxu0 0.0
        %698 = vmatpush1.msra.mxu0 0.0
        %699 = vmatprep.subr.mxu0 0.0
        %700 = vmatpush1.msra.mxu0 0.0
        %701 = vmatprep.subr.mxu0 0.0
        %702 = vmatpush1.msra.mxu0 0.0
        %703 = vmatprep.subr.mxu0 0.0
        %704 = vmatpush1.msra.mxu0 0.0
        %705 = vmatprep.subr.mxu0 0.0
        %706 = vmatpush1.msra.mxu0 0.0
        %707 = vmatprep.subr.mxu0 0.0
        %708 = vmatpush1.msra.mxu0 0.0
        %709 = vmatprep.subr.mxu0 0.0
        %710 = vmatpush1.msra.mxu0 %v674
        %711 = vmatprep.subr.mxu0 0.0
        %712 = vmatpush1.msra.mxu0 %v673
        %713 = vmatprep.subr.mxu0 0.0
        %714 = vmatpush1.msra.mxu0 %v672
        %715 = vmatprep.subr.mxu0 0.0
        %716 = vmatpush1.msra.mxu0 %v671
        %717 = vmatprep.subr.mxu0 0.0
        %718 = vmatpush2.msra.mxu0 0.0
        %719 = vmatprep.subr.mxu0 0.0
        %720 = vmatpush2.msra.mxu0 0.0
        %721 = vmatprep.subr.mxu0 0.0
        %722 = vmatpush2.msra.mxu0 0.0
        %723 = vmatprep.subr.mxu0 0.0
        %724 = vmatpush2.msra.mxu0 0.0
        %725 = vmatprep.subr.mxu0 0.0
        %726 = vmatpush2.msra.mxu0 0.0
        %727 = vmatprep.subr.mxu0 0.0
        %728 = vmatpush2.msra.mxu0 0.0
        %729 = vmatprep.subr.mxu0 0.0
        %730 = vmatpush2.msra.mxu0 0.0
        %731 = vmatprep.subr.mxu0 0.0
        %732 = vmatpush2.msra.mxu0 0.0
        %733 = vmatprep.subr.mxu0 0.0
        %734 = vmatpush2.msra.mxu0 0.0
        %735 = vmatprep.subr.mxu0 0.0
        %736 = vmatpush2.msra.mxu0 0.0
        %737 = vmatprep.subr.mxu0 0.0
        %738 = vmatpush2.msra.mxu0 0.0
        %739 = vmatprep.subr.mxu0 0.0
        %740 = vmatpush2.msra.mxu0 0.0
        %741 = vmatprep.subr.mxu0 0.0
        %742 = vmatpush2.msra.mxu0 0.0
        %743 = vmatprep.subr.mxu0 0.0
        %744 = vmatpush2.msra.mxu0 0.0
        %745 = vmatprep.subr.mxu0 0.0
        %746 = vmatpush2.msra.mxu0 0.0
        %747 = vmatprep.subr.mxu0 0.0
        %748 = vmatpush2.msra.mxu0 0.0
        %749 = vmatprep.mubr.f32.mxu0 0.0
        %750 = vmatmul.mubr.f32.gmra.mxu0 %v683
        %v751 = vpop.f32.mrf.mxu0
        %v752 = vadd.f32 %v680, %v751
        %v753 = vpop.f32.mrf.mxu0
        %754 = vdwg.mxu0
        %v755 = vld [vmem:[%s568] sm:$0xff]
        %v756 = vld [vmem:[%s568 + $0x8] sm:$0xff]
        %v757 = vld [vmem:[%s568 + $0x10] sm:$0xff]
        %v758 = vld [vmem:[%s568 + $0x18] sm:$0xff]
        %v759 = vld [vmem:[%s571] sm:$0x1]
        %v761 = vlaneseq
        %v762 = vshrl.u32 %v761, 7
        %v763 = vsub.s32 0, %v762
        %v764 = vrot.slane %v759, %v763
        %v767 = vsel %vm597, %v585, 0
        %769 = vmatprep.subr.mxu0 0.0
        %770 = vmatpush1.msra.mxu0 0.0
        %771 = vmatprep.subr.mxu0 0.0
        %772 = vmatpush1.msra.mxu0 0.0
        %773 = vmatprep.subr.mxu0 0.0
        %774 = vmatpush1.msra.mxu0 0.0
        %775 = vmatprep.subr.mxu0 0.0
        %776 = vmatpush1.msra.mxu0 0.0
        %777 = vmatprep.subr.mxu0 0.0
        %778 = vmatpush1.msra.mxu0 0.0
        %779 = vmatprep.subr.mxu0 0.0
        %780 = vmatpush1.msra.mxu0 0.0
        %781 = vmatprep.subr.mxu0 0.0
        %782 = vmatpush1.msra.mxu0 0.0
        %783 = vmatprep.subr.mxu0 0.0
        %784 = vmatpush1.msra.mxu0 0.0
        %785 = vmatprep.subr.mxu0 0.0
        %786 = vmatpush1.msra.mxu0 0.0
        %787 = vmatprep.subr.mxu0 0.0
        %788 = vmatpush1.msra.mxu0 0.0
        %789 = vmatprep.subr.mxu0 0.0
        %790 = vmatpush1.msra.mxu0 0.0
        %791 = vmatprep.subr.mxu0 0.0
        %792 = vmatpush1.msra.mxu0 0.0
        %793 = vmatprep.subr.mxu0 0.0
        %794 = vmatpush1.msra.mxu0 %v758
        %795 = vmatprep.subr.mxu0 0.0
        %796 = vmatpush1.msra.mxu0 %v757
        %797 = vmatprep.subr.mxu0 0.0
        %798 = vmatpush1.msra.mxu0 %v756
        %799 = vmatprep.subr.mxu0 0.0
        %800 = vmatpush1.msra.mxu0 %v755
        %801 = vmatprep.subr.mxu0 0.0
        %802 = vmatpush2.msra.mxu0 0.0
        %803 = vmatprep.subr.mxu0 0.0
        %804 = vmatpush2.msra.mxu0 0.0
        %805 = vmatprep.subr.mxu0 0.0
        %806 = vmatpush2.msra.mxu0 0.0
        %807 = vmatprep.subr.mxu0 0.0
        %808 = vmatpush2.msra.mxu0 0.0
        %809 = vmatprep.subr.mxu0 0.0
        %810 = vmatpush2.msra.mxu0 0.0
        %811 = vmatprep.subr.mxu0 0.0
        %812 = vmatpush2.msra.mxu0 0.0
        %813 = vmatprep.subr.mxu0 0.0
        %814 = vmatpush2.msra.mxu0 0.0
        %815 = vmatprep.subr.mxu0 0.0
        %816 = vmatpush2.msra.mxu0 0.0
        %817 = vmatprep.subr.mxu0 0.0
        %818 = vmatpush2.msra.mxu0 0.0
        %819 = vmatprep.subr.mxu0 0.0
        %820 = vmatpush2.msra.mxu0 0.0
        %821 = vmatprep.subr.mxu0 0.0
        %822 = vmatpush2.msra.mxu0 0.0
        %823 = vmatprep.subr.mxu0 0.0
        %824 = vmatpush2.msra.mxu0 0.0
        %825 = vmatprep.subr.mxu0 0.0
        %826 = vmatpush2.msra.mxu0 0.0
        %827 = vmatprep.subr.mxu0 0.0
        %828 = vmatpush2.msra.mxu0 0.0
        %829 = vmatprep.subr.mxu0 0.0
        %830 = vmatpush2.msra.mxu0 0.0
        %831 = vmatprep.subr.mxu0 0.0
        %832 = vmatpush2.msra.mxu0 0.0
        %833 = vmatprep.mubr.f32.mxu0 0.0
        %834 = vmatmul.mubr.f32.gmra.mxu0 %v767
        %v835 = vpop.f32.mrf.mxu0
        %v836 = vadd.f32 %v764, %v835
        %v837 = vpop.f32.mrf.mxu0
        %838 = vdwg.mxu0
        %v839 = vld [vmem:[%s3] sm:$0xff]
        %vm840 = vcmask 130048
        %v842 = vsel %vm840, %v668, 0
        %v845 = vsel %vm840, %v752, 0
        %847 = vmatprep.subr.mxu0 0.0
        %848 = vmatpush1.xpose.msra.mxu0 0.0
        %849 = vmatprep.subr.mxu0 0.0
        %850 = vmatpush1.xpose.msra.mxu0 0.0
        %851 = vmatprep.subr.mxu0 0.0
        %852 = vmatpush1.xpose.msra.mxu0 0.0
        %853 = vmatprep.subr.mxu0 0.0
        %854 = vmatpush1.xpose.msra.mxu0 0.0
        %855 = vmatprep.subr.mxu0 0.0
        %856 = vmatpush1.xpose.msra.mxu0 0.0
        %857 = vmatprep.subr.mxu0 0.0
        %858 = vmatpush1.xpose.msra.mxu0 0.0
        %859 = vmatprep.subr.mxu0 0.0
        %860 = vmatpush1.xpose.msra.mxu0 0.0
        %861 = vmatprep.subr.mxu0 0.0
        %862 = vmatpush1.xpose.msra.mxu0 0.0
        %863 = vmatprep.subr.mxu0 0.0
        %864 = vmatpush1.xpose.msra.mxu0 0.0
        %865 = vmatprep.subr.mxu0 0.0
        %866 = vmatpush1.xpose.msra.mxu0 0.0
        %867 = vmatprep.subr.mxu0 0.0
        %868 = vmatpush1.xpose.msra.mxu0 0.0
        %869 = vmatprep.subr.mxu0 0.0
        %870 = vmatpush1.xpose.msra.mxu0 0.0
        %871 = vmatprep.subr.mxu0 0.0
        %872 = vmatpush1.xpose.msra.mxu0 0.0
        %873 = vmatprep.subr.mxu0 0.0
        %874 = vmatpush1.xpose.msra.mxu0 0.0
        %875 = vmatprep.subr.mxu0 0.0
        %876 = vmatpush1.xpose.msra.mxu0 0.0
        %877 = vmatprep.subr.mxu0 0.0
        %878 = vmatpush1.xpose.msra.mxu0 %v845
        %879 = vmatprep.subr.mxu0 0.0
        %880 = vmatpush2.xpose.msra.mxu0 0.0
        %881 = vmatprep.subr.mxu0 0.0
        %882 = vmatpush2.xpose.msra.mxu0 0.0
        %883 = vmatprep.subr.mxu0 0.0
        %884 = vmatpush2.xpose.msra.mxu0 0.0
        %885 = vmatprep.subr.mxu0 0.0
        %886 = vmatpush2.xpose.msra.mxu0 0.0
        %887 = vmatprep.subr.mxu0 0.0
        %888 = vmatpush2.xpose.msra.mxu0 0.0
        %889 = vmatprep.subr.mxu0 0.0
        %890 = vmatpush2.xpose.msra.mxu0 0.0
        %891 = vmatprep.subr.mxu0 0.0
        %892 = vmatpush2.xpose.msra.mxu0 0.0
        %893 = vmatprep.subr.mxu0 0.0
        %894 = vmatpush2.xpose.msra.mxu0 0.0
        %895 = vmatprep.subr.mxu0 0.0
        %896 = vmatpush2.xpose.msra.mxu0 0.0
        %897 = vmatprep.subr.mxu0 0.0
        %898 = vmatpush2.xpose.msra.mxu0 0.0
        %899 = vmatprep.subr.mxu0 0.0
        %900 = vmatpush2.xpose.msra.mxu0 0.0
        %901 = vmatprep.subr.mxu0 0.0
        %902 = vmatpush2.xpose.msra.mxu0 0.0
        %903 = vmatprep.subr.mxu0 0.0
        %904 = vmatpush2.xpose.msra.mxu0 0.0
        %905 = vmatprep.subr.mxu0 0.0
        %906 = vmatpush2.xpose.msra.mxu0 0.0
        %907 = vmatprep.subr.mxu0 0.0
        %908 = vmatpush2.xpose.msra.mxu0 0.0
        %909 = vmatprep.subr.mxu0 0.0
        %910 = vmatpush2.xpose.msra.mxu0 0.0
        %911 = vmatprep.mubr.f32.mxu0 0.0
        %912 = vmatmul.mubr.f32.gmra.mxu0 %v842
        %v913 = vpop.f32.mrf.mxu0
        %v914 = vadd.f32 %v839, %v913
        %v915 = vpop.f32.mrf.mxu0
        %916 = vdwg.mxu0
        %vm917 = vcmask 64512
        %v918 = vsel %vm917, %v914, -inf
        %919 = vmax.xlane.f32.xlu0 %v918
        %v920 = vpop.xlane.xlu0 %919
        %v921 = vsub.f32 %v914, %v920
        %v922 = vmul.f32 %v921, 1.442695
        %v923 = vpow.pop %v922
        %v924 = vsel %vm917, %v923, 0.0
        %925 = vadd.xlane.f32.xlu0 %v924
        %v926 = vpop.xlane.xlu0 %925
        %v927 = vrcp.pop %v926
        %v928 = vmul.f32 %v923, %v927
        %v930 = vsel %vm917, %v928, 0
        %932 = vmatprep.subr.mxu0 0.0
        %933 = vmatpush1.msra.mxu0 0.0
        %934 = vmatprep.subr.mxu0 0.0
        %935 = vmatpush1.msra.mxu0 0.0
        %936 = vmatprep.subr.mxu0 0.0
        %937 = vmatpush1.msra.mxu0 0.0
        %938 = vmatprep.subr.mxu0 0.0
        %939 = vmatpush1.msra.mxu0 0.0
        %940 = vmatprep.subr.mxu0 0.0
        %941 = vmatpush1.msra.mxu0 0.0
        %942 = vmatprep.subr.mxu0 0.0
        %943 = vmatpush1.msra.mxu0 0.0
        %944 = vmatprep.subr.mxu0 0.0
        %945 = vmatpush1.msra.mxu0 0.0
        %946 = vmatprep.subr.mxu0 0.0
        %947 = vmatpush1.msra.mxu0 0.0
        %948 = vmatprep.subr.mxu0 0.0
        %949 = vmatpush1.msra.mxu0 0.0
        %950 = vmatprep.subr.mxu0 0.0
        %951 = vmatpush1.msra.mxu0 0.0
        %952 = vmatprep.subr.mxu0 0.0
        %953 = vmatpush1.msra.mxu0 0.0
        %954 = vmatprep.subr.mxu0 0.0
        %955 = vmatpush1.msra.mxu0 0.0
        %956 = vmatprep.subr.mxu0 0.0
        %957 = vmatpush1.msra.mxu0 0.0
        %958 = vmatprep.subr.mxu0 0.0
        %959 = vmatpush1.msra.mxu0 0.0
        %960 = vmatprep.subr.mxu0 0.0
        %961 = vmatpush1.msra.mxu0 0.0
        %962 = vmatprep.subr.mxu0 0.0
        %963 = vmatpush1.msra.mxu0 %v836
        %964 = vmatprep.subr.mxu0 0.0
        %965 = vmatpush2.msra.mxu0 0.0
        %966 = vmatprep.subr.mxu0 0.0
        %967 = vmatpush2.msra.mxu0 0.0
        %968 = vmatprep.subr.mxu0 0.0
        %969 = vmatpush2.msra.mxu0 0.0
        %970 = vmatprep.subr.mxu0 0.0
        %971 = vmatpush2.msra.mxu0 0.0
        %972 = vmatprep.subr.mxu0 0.0
        %973 = vmatpush2.msra.mxu0 0.0
        %974 = vmatprep.subr.mxu0 0.0
        %975 = vmatpush2.msra.mxu0 0.0
        %976 = vmatprep.subr.mxu0 0.0
        %977 = vmatpush2.msra.mxu0 0.0
        %978 = vmatprep.subr.mxu0 0.0
        %979 = vmatpush2.msra.mxu0 0.0
        %980 = vmatprep.subr.mxu0 0.0
        %981 = vmatpush2.msra.mxu0 0.0
        %982 = vmatprep.subr.mxu0 0.0
        %983 = vmatpush2.msra.mxu0 0.0
        %984 = vmatprep.subr.mxu0 0.0
        %985 = vmatpush2.msra.mxu0 0.0
        %986 = vmatprep.subr.mxu0 0.0
        %987 = vmatpush2.msra.mxu0 0.0
        %988 = vmatprep.subr.mxu0 0.0
        %989 = vmatpush2.msra.mxu0 0.0
        %990 = vmatprep.subr.mxu0 0.0
        %991 = vmatpush2.msra.mxu0 0.0
        %992 = vmatprep.subr.mxu0 0.0
        %993 = vmatpush2.msra.mxu0 0.0
        %994 = vmatprep.subr.mxu0 0.0
        %995 = vmatpush2.msra.mxu0 0.0
        %996 = vmatprep.mubr.f32.mxu0 0.0
        %997 = vmatmul.mubr.f32.gmra.mxu0 %v930
        %v998 = vpop.f32.mrf.mxu0
        %v999 = vadd.f32 0.0, %v998
        %v1000 = vpop.f32.mrf.mxu0
        %1001 = vdwg.mxu0
        %v1002 = vld [vmem:[#allocation2] sm:$0xff]
        %v1003 = vld [vmem:[%s576] sm:$0xff]
        %v1004 = vld [vmem:[%s576 + $0x8] sm:$0xff]
        %v1006 = vsel %vm840, %v999, 0
        %1008 = vmatprep.subr.mxu0 0.0
        %1009 = vmatpush1.msra.mxu0 0.0
        %1010 = vmatprep.subr.mxu0 0.0
        %1011 = vmatpush1.msra.mxu0 0.0
        %1012 = vmatprep.subr.mxu0 0.0
        %1013 = vmatpush1.msra.mxu0 0.0
        %1014 = vmatprep.subr.mxu0 0.0
        %1015 = vmatpush1.msra.mxu0 0.0
        %1016 = vmatprep.subr.mxu0 0.0
        %1017 = vmatpush1.msra.mxu0 0.0
        %1018 = vmatprep.subr.mxu0 0.0
        %1019 = vmatpush1.msra.mxu0 0.0
        %1020 = vmatprep.subr.mxu0 0.0
        %1021 = vmatpush1.msra.mxu0 0.0
        %1022 = vmatprep.subr.mxu0 0.0
        %1023 = vmatpush1.msra.mxu0 0.0
        %1024 = vmatprep.subr.mxu0 0.0
        %1025 = vmatpush1.msra.mxu0 0.0
        %1026 = vmatprep.subr.mxu0 0.0
        %1027 = vmatpush1.msra.mxu0 0.0
        %1028 = vmatprep.subr.mxu0 0.0
        %1029 = vmatpush1.msra.mxu0 0.0
        %1030 = vmatprep.subr.mxu0 0.0
        %1031 = vmatpush1.msra.mxu0 0.0
        %1032 = vmatprep.subr.mxu0 0.0
        %1033 = vmatpush1.msra.mxu0 0.0
        %1034 = vmatprep.subr.mxu0 0.0
        %1035 = vmatpush1.msra.mxu0 0.0
        %1036 = vmatprep.subr.mxu0 0.0
        %1037 = vmatpush1.msra.mxu0 %v1004
        %1038 = vmatprep.subr.mxu0 0.0
        %1039 = vmatpush1.msra.mxu0 %v1003
        %1040 = vmatprep.subr.mxu0 0.0
        %1041 = vmatpush2.msra.mxu0 0.0
        %1042 = vmatprep.subr.mxu0 0.0
        %1043 = vmatpush2.msra.mxu0 0.0
        %1044 = vmatprep.subr.mxu0 0.0
        %1045 = vmatpush2.msra.mxu0 0.0
        %1046 = vmatprep.subr.mxu0 0.0
        %1047 = vmatpush2.msra.mxu0 0.0
        %1048 = vmatprep.subr.mxu0 0.0
        %1049 = vmatpush2.msra.mxu0 0.0
        %1050 = vmatprep.subr.mxu0 0.0
        %1051 = vmatpush2.msra.mxu0 0.0
        %1052 = vmatprep.subr.mxu0 0.0
        %1053 = vmatpush2.msra.mxu0 0.0
        %1054 = vmatprep.subr.mxu0 0.0
        %1055 = vmatpush2.msra.mxu0 0.0
        %1056 = vmatprep.subr.mxu0 0.0
        %1057 = vmatpush2.msra.mxu0 0.0
        %1058 = vmatprep.subr.mxu0 0.0
        %1059 = vmatpush2.msra.mxu0 0.0
        %1060 = vmatprep.subr.mxu0 0.0
        %1061 = vmatpush2.msra.mxu0 0.0
        %1062 = vmatprep.subr.mxu0 0.0
        %1063 = vmatpush2.msra.mxu0 0.0
        %1064 = vmatprep.subr.mxu0 0.0
        %1065 = vmatpush2.msra.mxu0 0.0
        %1066 = vmatprep.subr.mxu0 0.0
        %1067 = vmatpush2.msra.mxu0 0.0
        %1068 = vmatprep.subr.mxu0 0.0
        %1069 = vmatpush2.msra.mxu0 0.0
        %1070 = vmatprep.subr.mxu0 0.0
        %1071 = vmatpush2.msra.mxu0 0.0
        %1072 = vmatprep.mubr.f32.mxu0 0.0
        %1073 = vmatmul.mubr.f32.gmra.mxu0 %v1006
        %v1074 = vpop.f32.mrf.mxu0
        %v1075 = vadd.f32 0.0, %v1074
        %v1076 = vpop.f32.mrf.mxu0
        %1077 = vdwg.mxu0
        %v1078 = vadd.f32 %v1002, %v1075
        %1079 = vst.msk [vmem:[#allocation2] sm:$0xff] %vm597, %v1078
        %p1080 = scmp.eq.s32.totalorder %s31, 1
        // Predicated region
        $region73: #{tpu_custom_call.1} parent=67 // pred_check
          %p1081 = pneg %p1080
        $region74: #{tpu_custom_call.1} parent=67 // pred_check_branch
          %1083 = sbr.rel (%p1081) target = $region76
        $region75: #{tpu_custom_call.1} parent=67 // pred_region
          %v1084 = vld [vmem:[#allocation2] sm:$0xff]
          %v1085 = vld [vmem:[%s11] sm:$0x1]
          %v1087 = vlaneseq
          %v1088 = vshrl.u32 %v1087, 7
          %v1089 = vsub.s32 0, %v1088
          %v1090 = vrot.slane %v1085, %v1089
          %v1092 = vadd.f32 %v1084, %v1090
          %1093 = vst.msk [vmem:[%s535] sm:$0xff] %vm597, %v1092
        $region76: #{tpu_custom_call.1} parent=67 // pred_fallthru
          _
        %s1094 = sand.u32 %s348, 1
        %s1095 = scalar_lea.sflag [#allocation4], %s1094
        %s1096 = sand.u32 %s348, 1
        %s1097 = smul.addr %s1096, 8
        %s1098 = scalar_lea.vmem [#allocation3], %s1097
        // Predicated region
        $region77: #{tpu_custom_call.1} parent=67 // pred_check
          %p1099 = pneg %p358
        $region78: #{tpu_custom_call.1} parent=67 // pred_check_branch
          %1101 = sbr.rel (%p1099) target = $region80
        $region79: #{tpu_custom_call.1} parent=67 // pred_region
          %s1103 = ssub.s32 128, 128
          %1104 = vsyncadd %s1095, %s1103
          %s1105 = smul.addr %s30, 128
          %s1106 = scalar_lea.hbm %s12, %s1105
          %s1108 = sshll.u32 %s1098, 4
          %s1109 = int_to_ptr.vmem [resolvable:$true] %s1108
          %1111 = dma.vmem_to_hbm [thread:$0]  %s1109, 128, %s1106, %s1095
        $region80: #{tpu_custom_call.1} parent=67 // pred_fallthru
          _
      $region68: #{tpu_custom_call.1} parent=5 // pred_fallthru
        _
      %p1112 = scmp.le.s32.totalorder 2, %s21
      // Predicated region
      $region81: #{tpu_custom_call.1} parent=5 // pred_check
        %p1113 = pneg %p1112
      $region82: #{tpu_custom_call.1} parent=5 // pred_check_branch
        %1115 = sbr.rel (%p1113) target = $region84
      $region83: #{tpu_custom_call.1} parent=5 // pred_region
        %s1116 = ssub.s32 %s21, 2
        // Predicated region
        $region85: #{tpu_custom_call.1} parent=83 // pred_check
          %p1117 = pneg %p364
        $region86: #{tpu_custom_call.1} parent=83 // pred_check_branch
          %1119 = sbr.rel (%p1117) target = $region88
        $region87: #{tpu_custom_call.1} parent=83 // pred_region
          %s1120 = sand.u32 %s349, 1
          %s1121 = scalar_lea.sflag [#allocation4], %s1120
          %s1122 = sand.u32 %s349, 1
          %s1123 = smul.addr %s1122, 8
          %s1124 = scalar_lea.vmem [#allocation3], %s1123
          %1125 = dma.done %s1121, 128
        $region88: #{tpu_custom_call.1} parent=83 // pred_fallthru
          _
      $region84: #{tpu_custom_call.1} parent=5 // pred_fallthru
        _
    $region6: #{tpu_custom_call.1} parent=1 // loop_footer
      %s25 = sadd.s32 1, %s21
    $region7: #{tpu_custom_call.1} parent=1 // loop_footer_branch
      %20 = sbr.rel target = $region3
    $region8: #{tpu_custom_call.1} parent=1 // loop_exit
      _
    %1126 = vsyncpa [#allocation4], 1
    %s1127 = scalar_lea.sflag [#allocation4], 1
    %1128 = vsyncpa %s1127, 1

</llo_original>
